<compile_context>
chip_gen: v6e
topology: v6e:2x2x1
jax: 0.10.0
libtpu: 0.0.40
codegen_flags: <defaults>
</compile_context>

<pallas_src>
import numpy as np
import jax
import jax.numpy as jnp
from jax.experimental import pallas as pl
from jax.experimental.pallas import tpu as pltpu


def _round_up(x, m):
    return (x + m - 1) // m * m


def basic_conv_kernel(x_ref, w_ref, shift_ref, o_ref):
    """Single invocation (grid=()).

    x_ref     : (N, Hp, P)        bf16 packed input (H zero-padded; row layout
                                  w*Cin + ci, lane-padded to P; W padding is
                                  folded into the band)
    w_ref     : (KH*P, Wo*Cout)   bf16 BN-scale-folded block-banded weights
    shift_ref : (1, Wo*Cout)      f32 BN shift tiled over Wo
    o_ref     : (N, Ho, Wo*Cout)  f32 lane-dense output (Wo*Cout = 128 here)
    """
    N, Hp, P = x_ref.shape
    _, Ho, WoC = o_ref.shape
    KH = w_ref.shape[0] // P

    # Fold N into the MXU M dimension and fuse the KH taps into one matmul.
    # LHS row (n*Ho + ho) = [x[n, ho+0, :], x[n, ho+1, :], ..., x[n, ho+KH-1, :]].
    # Each tap is a Ref slice (offset vector load, no in-vreg sublane
    # realignment); the concat is lane-aligned because P % 128 == 0.
    lhs = jnp.concatenate(
        [x_ref[:, pl.ds(kh, Ho), :].reshape(N * Ho, P) for kh in range(KH)],
        axis=-1)                                                # (N*Ho, KH*P)

    acc = jnp.dot(lhs, w_ref[...], preferred_element_type=jnp.float32)

    # BN shift (scale already folded into the weights) + ReLU, single store.
    y = jnp.maximum(acc + shift_ref[...], 0.0)
    o_ref[...] = y.reshape(N, Ho, WoC).astype(o_ref.dtype)


def make_basic_conv_params(weight_oihw, gamma, beta, running_mean, running_var,
                           *, H, W, stride=1, padding=1, dilation=1, groups=1,
                           eps=1e-5, compute_dtype=jnp.bfloat16):
    """One-time module init (pure numpy): fold BN, build the block-banded
    weight matrix and tiled shift.  No per-call XLA ops."""
    # TODO(synk): stride>1 / dilation>1 / groups>1 variants are not implemented
    #             (this BasicConv instance uses the defaults: 1/1/1).
    assert stride == 1 and dilation == 1 and groups == 1

    weight = np.asarray(weight_oihw, np.float32)
    gamma = np.asarray(gamma, np.float32)
    beta = np.asarray(beta, np.float32)
    mean = np.asarray(running_mean, np.float32)
    var = np.asarray(running_var, np.float32)

    Cout, Cin, KH, KW = weight.shape
    Hp = H + 2 * padding
    Ho = Hp - KH + 1
    Wo = W + 2 * padding - KW + 1
    WoC = Wo * Cout
    P = _round_up(W * Cin, 128)          # lane-aligned packed input row width

    # Fold BatchNorm (eval mode): scale into weights, shift applied in-kernel.
    scale = gamma / np.sqrt(var + eps)                                  # (Cout,)
    shift = beta - mean * scale                                         # (Cout,)
    w_hwio = weight.transpose(2, 3, 1, 0) * scale[None, None, None, :]  # (KH,KW,Cin,Cout)

    # Block-banded weights: the kw shift AND the W zero-padding are folded into
    # the band, so the kernel needs no per-tap W slicing and the input needs no
    # W padding.  band[kh*P + w_in*Cin + ci, wo*Cout + co] = w[kh, kw, ci, co]
    # with w_in = wo + kw - padding (entries falling in the zero-pad are skipped).
    band = np.zeros((KH * P, WoC), np.float32)
    for kh in range(KH):
        for kw in range(KW):
            for wo in range(Wo):
                w_in = wo + kw - padding
                if 0 <= w_in < W:
                    band[kh * P + w_in * Cin: kh * P + (w_in + 1) * Cin,
                         wo * Cout:(wo + 1) * Cout] = w_hwio[kh, kw]

    # TODO(synk): band is O(KH * W^2 * Cin * Cout); at larger shapes tile Wo
    #             (extra grid axis over the band's output-column blocks) before
    #             it exceeds VMEM (64 MiB physical on v7x).

    return {
        "band": jnp.asarray(band, compute_dtype),
        "shift": jnp.asarray(np.tile(shift, Wo)[None, :], np.float32),
        "compute_dtype": compute_dtype,
        "dims": {"H": H, "W": W, "Hp": Hp, "Ho": Ho, "Wo": Wo,
                 "Cin": Cin, "Cout": Cout, "KH": KH, "P": P,
                 "padding": padding},
    }


@jax.jit
def basic_conv_apply(x_packed, band, shift):
    """Channels-last packed entry point: one Pallas call, zero wrapper ops."""
    N, Hp, P = x_packed.shape
    KH = band.shape[0] // P
    WoC = band.shape[1]
    Ho = Hp - KH + 1
    return pl.pallas_call(
        basic_conv_kernel,
        out_shape=jax.ShapeDtypeStruct((N, Ho, WoC), jnp.float32),
        in_specs=[
            pl.BlockSpec(memory_space=pltpu.MemorySpace.VMEM),
            pl.BlockSpec(memory_space=pltpu.MemorySpace.VMEM),
            pl.BlockSpec(memory_space=pltpu.MemorySpace.VMEM),
        ],
        out_specs=pl.BlockSpec(memory_space=pltpu.MemorySpace.VMEM),
    )(x_packed, band, shift)


def pack_input_nchw(x_nchw, params):
    """Boundary glue (one transpose + one pad).  In a real network keep the
    activations packed / channels-last end-to-end so this disappears."""
    d = params["dims"]
    N, Cin, H, W = x_nchw.shape
    x_flat = jnp.transpose(x_nchw, (0, 2, 3, 1)).reshape(N, H, W * Cin)
    x_packed = jnp.pad(x_flat, ((0, 0), (d["padding"], d["padding"]),
                                (0, d["P"] - W * Cin)))
    return x_packed.astype(params["compute_dtype"])


def unpack_output_nchw(out_packed, params):
    """Boundary glue: packed (N, Ho, Wo*Cout) -> NCHW."""
    d = params["dims"]
    N, Ho, _ = out_packed.shape
    return jnp.transpose(out_packed.reshape(N, Ho, d["Wo"], d["Cout"]),
                         (0, 3, 1, 2))


def _reference(x, weight, gamma, beta, running_mean, running_var,
               *, padding=1, eps=1e-5, compute_dtype=jnp.bfloat16):
    """Conv+BN(eval)+ReLU with the same bf16 rounding of x / folded weights as
    the kernel, so the comparison isolates kernel math (f32 accumulation)."""
    scale = gamma / jnp.sqrt(running_var + eps)
    shift = beta - running_mean * scale
    w_folded = (weight * scale[:, None, None, None]
                ).astype(compute_dtype).astype(jnp.float32)
    x_q = x.astype(compute_dtype).astype(jnp.float32)
    conv = jax.lax.conv_general_dilated(
        x_q, w_folded, window_strides=(1, 1),
        padding=((padding, padding), (padding, padding)),
        dimension_numbers=("NCHW", "OIHW", "NCHW"),
        precision=jax.lax.Precision.HIGHEST)
    return jnp.maximum(conv + shift[None, :, None, None], 0.0)


if __name__ == "__main__":
    # Small deterministic instance: BasicConv(4, 8, kernel_size=3, padding=1)
    N, Cin, H, W = 2, 4, 16, 16
    Cout, KH, KW = 8, 3, 3
    padding = 1

    key = jax.random.PRNGKey(0)
    k_x, k_w, k_g, k_b, k_m, k_v = jax.random.split(key, 6)

    x = jax.random.normal(k_x, (N, Cin, H, W), dtype=jnp.float32)
    weight = jax.random.normal(k_w, (Cout, Cin, KH, KW), dtype=jnp.float32) * 0.1
    gamma = 1.0 + 0.1 * jax.random.normal(k_g, (Cout,), dtype=jnp.float32)
    beta = 0.1 * jax.random.normal(k_b, (Cout,), dtype=jnp.float32)
    running_mean = 0.1 * jax.random.normal(k_m, (Cout,), dtype=jnp.float32)
    running_var = jnp.abs(jax.random.normal(k_v, (Cout,), dtype=jnp.float32)) + 0.5

    # One-time init: fold BN, build block-banded weights + shift (numpy).
    params = make_basic_conv_params(
        np.asarray(weight), np.asarray(gamma), np.asarray(beta),
        np.asarray(running_mean), np.asarray(running_var),
        H=H, W=W, stride=1, padding=padding)

    # Forward: boundary packing -> single Pallas call -> boundary unpacking.
    x_packed = pack_input_nchw(x, params)
    out_packed = jax.block_until_ready(
        basic_conv_apply(x_packed, params["band"], params["shift"]))
    out = unpack_output_nchw(out_packed, params)

    ref = _reference(x, weight, gamma, beta, running_mean, running_var,
                     padding=padding)
    np.testing.assert_allclose(np.asarray(out), np.asarray(ref),
                               rtol=1e-4, atol=1e-4)
    print("KERNEL_OK")
</pallas_src>

<mosaic_0001>
module attributes {stable_mosaic.version = 11 : i64} {
  func.func @basic_conv_kernel(%arg0: memref<2x18x128xbf16, #tpu.memory_space<vmem>>, %arg1: memref<384x128xbf16, #tpu.memory_space<vmem>>, %arg2: memref<1x128xf32, #tpu.memory_space<vmem>>, %arg3: memref<2x16x128xf32, #tpu.memory_space<vmem>>) attributes {dimension_semantics = [], scalar_prefetch = 0 : i64, scratch_operands = 0 : i64, tpu.core_type = #tpu.core_type<tc>} {
    %c0 = arith.constant 0 : index
    %c0_0 = arith.constant 0 : index
    %c0_1 = arith.constant 0 : index
    %0 = vector.load %arg0[%c0, %c0_0, %c0_1] : memref<2x18x128xbf16, #tpu.memory_space<vmem>>, vector<2x16x128xbf16>
    %1 = vector.shape_cast %0 : vector<2x16x128xbf16> to vector<32x128xbf16>
    %c0_2 = arith.constant 0 : index
    %c1 = arith.constant 1 : index
    %c0_3 = arith.constant 0 : index
    %2 = vector.load %arg0[%c0_2, %c1, %c0_3] : memref<2x18x128xbf16, #tpu.memory_space<vmem>>, vector<2x16x128xbf16>
    %3 = vector.shape_cast %2 : vector<2x16x128xbf16> to vector<32x128xbf16>
    %c0_4 = arith.constant 0 : index
    %c2 = arith.constant 2 : index
    %c0_5 = arith.constant 0 : index
    %4 = vector.load %arg0[%c0_4, %c2, %c0_5] : memref<2x18x128xbf16, #tpu.memory_space<vmem>>, vector<2x16x128xbf16>
    %5 = vector.shape_cast %4 : vector<2x16x128xbf16> to vector<32x128xbf16>
    %6 = tpu.concatenate %1, %3, %5 in 1 : vector<32x128xbf16>, vector<32x128xbf16>, vector<32x128xbf16> -> vector<32x384xbf16>
    %c0_6 = arith.constant 0 : index
    %c0_7 = arith.constant 0 : index
    %7 = vector.load %arg1[%c0_6, %c0_7] : memref<384x128xbf16, #tpu.memory_space<vmem>>, vector<384x128xbf16>
    %cst = arith.constant dense<0.000000e+00> : vector<32x128xf32>
    %8 = tpu.matmul %6, %7, %cst {dimension_numbers = #tpu.dot_dimension_numbers<[1], [0], [0], [1], [0, 0, 1, 1], [], []>} : vector<32x384xbf16>, vector<384x128xbf16>, vector<32x128xf32> -> vector<32x128xf32>
    %c0_8 = arith.constant 0 : index
    %c0_9 = arith.constant 0 : index
    %9 = vector.load %arg2[%c0_8, %c0_9] : memref<1x128xf32, #tpu.memory_space<vmem>>, vector<1x128xf32>
    %10 = vector.broadcast %9 : vector<1x128xf32> to vector<32x128xf32>
    %11 = arith.addf %8, %10 : vector<32x128xf32>
    %cst_10 = arith.constant 0.000000e+00 : f32
    %12 = vector.broadcast %cst_10 : f32 to vector<32x128xf32>
    %13 = arith.maximumf %11, %12 : vector<32x128xf32>
    %14 = vector.shape_cast %13 : vector<32x128xf32> to vector<2x16x128xf32>
    %c0_11 = arith.constant 0 : index
    %c0_12 = arith.constant 0 : index
    %c0_13 = arith.constant 0 : index
    %15 = vector.load %arg3[%c0_11, %c0_12, %c0_13] : memref<2x16x128xf32, #tpu.memory_space<vmem>>, vector<2x16x128xf32>
    tpu.vector_store %arg3[%c0_11, %c0_12, %c0_13], %14 {strides = array<i32>} : memref<2x16x128xf32, #tpu.memory_space<vmem>>, vector<2x16x128xf32>,
    return
  }
}

</mosaic_0001>

<llo_original>
// kernel: basic_conv_apply.1
$region0: #{basic_conv_apply.1}
  #allocation0 [shape = 'u32[]', space=smem, size = 0x4, offset = 0x4, fixed_abs, tag = 'smem constant byte address 0x4 - core index']
  #allocation1 [shape = 'u32[144,128]{1,0:T(1,128)}', space=vmem, size = 0x12000, scoped, tag = 'internal scratch']
  %s0 = inlined_call_operand.vmem [shape: bf16[2,18,128], index: 0, kind: input, shape index: {}]
  %s1 = inlined_call_operand.hbm [shape: bf16[384,128], index: 1, kind: input, shape index: {}]
  %s2 = inlined_call_operand.vmem [shape: f32[1,128], index: 2, kind: input, shape index: {}]
  %s3 = inlined_call_operand.hbm [shape: f32[2,16,128], index: 3, kind: output, shape index: {}]
  %s4 = sld [smem:[#allocation0]]
  $region26: #{basic_conv_apply.1} parent=0
    _
  %s6 = ssub.s32 1, %s4
  %s7 = scalar_select 0, %s6, %s4
  $region1: #{basic_conv_apply.1} parent=0
    #allocation2 [shape = 'u8[98304]{0}', space=vmem, size = 0x18000, scoped, tag = 'input window, operand 1, single buffered']
    #allocation3 [shape = 's32[1]{0}', space=sflag, size = 0x4, scoped, tag = 'scoped memory for basic_conv_apply.1']
    #allocation4 [shape = 's32[1]{0}', space=sflag, size = 0x4, scoped, tag = 'scoped memory for basic_conv_apply.1']
    #allocation5 [shape = 'u8[16384]{0}', space=vmem, size = 0x4000, scoped, tag = 'output window, operand 0, single buffered']
    %8 = vsyncpa [#allocation3], 0
    %9 = vsyncpa [#allocation4], 0
    // Predicated region
    $region2: #{basic_conv_apply.1} parent=1 // pred_check
      _
    $region3: #{basic_conv_apply.1} parent=1 // pred_check_branch
      %11 = sbr.rel (0) target = $region5
    $region4: #{basic_conv_apply.1} parent=1 // pred_region
      _
    $region5: #{basic_conv_apply.1} parent=1 // pred_fallthru
      _
    // Predicated region
    $region6: #{basic_conv_apply.1} parent=1 // pred_check
      _
    $region7: #{basic_conv_apply.1} parent=1 // pred_check_branch
      %13 = sbr.rel (0) target = $region9
    $region8: #{basic_conv_apply.1} parent=1 // pred_region
      %s15 = ssub.s32 3072, 3072
      %16 = vsyncadd [#allocation3], %s15
      %s17 = sshll.u32 [#allocation2], 4
      %s18 = int_to_ptr.vmem [resolvable:$true] %s17
      %23 = dma.hbm_to_vmem [thread:$0]  %s1, 3072, %s18, [#allocation3], 64, 64, 4
    $region9: #{basic_conv_apply.1} parent=1 // pred_fallthru
      _
    // Predicated region
    $region10: #{basic_conv_apply.1} parent=1 // pred_check
      _
    $region11: #{basic_conv_apply.1} parent=1 // pred_check_branch
      %25 = sbr.rel (0) target = $region13
    $region12: #{basic_conv_apply.1} parent=1 // pred_region
      _
    $region13: #{basic_conv_apply.1} parent=1 // pred_fallthru
      _
    // Predicated region
    $region14: #{basic_conv_apply.1} parent=1 // pred_check
      _
    $region15: #{basic_conv_apply.1} parent=1 // pred_check_branch
      %27 = sbr.rel (0) target = $region17
    $region16: #{basic_conv_apply.1} parent=1 // pred_region
      %28 = dma.done [#allocation3], 3072
    $region17: #{basic_conv_apply.1} parent=1 // pred_fallthru
      _
    %v30 = vld [vmem:[%s0] sm:$0xf]
    %v31 = vld [vmem:[%s0 + $0x4] sm:$0xf]
    %v32 = vld [vmem:[%s0 + $0xc] sm:$0xf]
    %v33 = vld [vmem:[%s0 + $0x10] sm:$0xf]
    %v34 = vld [vmem:[%s0 + $0x8] sm:$0x1]
    %v35 = vld [vmem:[%s0 + $0x14] sm:$0x1]
    %vm36 = vsmask.f32 3328
    %vm37 = vsmask.f32 7440
    %vm38 = vmor %vm36, %vm37
    %v40 = vshrl.u32 %v30, 16
    %v42 = vrot.slane %v40, 4
    %v43 = vshll.u32 %v30, 16
    %v45 = vrot.slane %v43, 5
    %v46 = vor.u32 %v42, %v45
    %v47 = vrot.slane %v46, 4
    %v49 = vshll.u32 %v31, 16
    %v51 = vrot.slane %v49, 5
    %v52 = vsel %vm38, %v47, %v51
    %v53 = vshrl.u32 %v31, 16
    %v55 = vrot.slane %v53, 4
    %v56 = vor.u32 %v55, %v51
    %v57 = vrot.slane %v56, 4
    %v59 = vshll.u32 %v34, 16
    %v61 = vrot.slane %v59, 5
    %v62 = vsel %vm38, %v57, %v61
    %v64 = vshrl.u32 %v32, 16
    %v66 = vrot.slane %v64, 4
    %v67 = vshll.u32 %v32, 16
    %v69 = vrot.slane %v67, 5
    %v70 = vor.u32 %v66, %v69
    %v71 = vrot.slane %v70, 4
    %v73 = vshll.u32 %v33, 16
    %v75 = vrot.slane %v73, 5
    %v76 = vsel %vm38, %v71, %v75
    %v77 = vshrl.u32 %v33, 16
    %v79 = vrot.slane %v77, 4
    %v80 = vor.u32 %v79, %v75
    %v81 = vrot.slane %v80, 4
    %v83 = vshll.u32 %v35, 16
    %v85 = vrot.slane %v83, 5
    %v86 = vsel %vm38, %v81, %v85
    %v87 = vld [vmem:[%s0] sm:$0xe]
    %v88 = vld [vmem:[%s0 + $0xc] sm:$0xe]
    %vm95 = vcmask 1042432
    %vm96 = vcmask 1046532
    %vm97 = vmor %vm95, %vm96
    %v98 = vrot.slane %v87, 5
    %v99 = vrot.slane %v98, 4
    %v100 = vrot.slane %v31, 5
    %v101 = vsel %vm97, %v99, %v100
    %v102 = vrot.slane %v100, 4
    %v103 = vrot.slane %v34, 5
    %v104 = vsel %vm97, %v102, %v103
    %v105 = vrot.slane %v88, 5
    %v106 = vrot.slane %v105, 4
    %v107 = vrot.slane %v33, 5
    %v108 = vsel %vm97, %v106, %v107
    %v109 = vrot.slane %v107, 4
    %v110 = vrot.slane %v35, 5
    %v111 = vsel %vm97, %v109, %v110
    %v114 = vunpack.c.l.b16 %v30
    %v115 = vunpack.c.l.b16 %v31
    %v116 = vunpack.c.l.b16 %v32
    %v117 = vunpack.c.l.b16 %v33
    %v118 = vpack.c.b16 %v115, %v114
    %v119 = vpack.c.b16 %v117, %v116
    %v122 = vunpack.c.l.b16 %v52
    %v123 = vunpack.c.l.b16 %v62
    %v124 = vunpack.c.l.b16 %v76
    %v125 = vunpack.c.l.b16 %v86
    %v126 = vpack.c.b16 %v123, %v122
    %v127 = vpack.c.b16 %v125, %v124
    %v130 = vunpack.c.l.b16 %v101
    %v131 = vunpack.c.l.b16 %v104
    %v132 = vunpack.c.l.b16 %v108
    %v133 = vunpack.c.l.b16 %v111
    %v134 = vpack.c.b16 %v131, %v130
    %v135 = vpack.c.b16 %v133, %v132
    %v138 = vld [vmem:[#allocation2] sm:$0xf]
    %v139 = vld [vmem:[#allocation2 + $0x4] sm:$0xf]
    %v140 = vld [vmem:[#allocation2 + $0x8] sm:$0xf]
    %v141 = vld [vmem:[#allocation2 + $0xc] sm:$0xf]
    %v142 = vld [vmem:[#allocation2 + $0x10] sm:$0xf]
    %v143 = vld [vmem:[#allocation2 + $0x14] sm:$0xf]
    %v144 = vld [vmem:[#allocation2 + $0x18] sm:$0xf]
    %v145 = vld [vmem:[#allocation2 + $0x1c] sm:$0xf]
    %v146 = vld [vmem:[#allocation2 + $0x20] sm:$0xf]
    %v147 = vld [vmem:[#allocation2 + $0x24] sm:$0xf]
    %v148 = vld [vmem:[#allocation2 + $0x28] sm:$0xf]
    %v149 = vld [vmem:[#allocation2 + $0x2c] sm:$0xf]
    %v150 = vld [vmem:[#allocation2 + $0x30] sm:$0xf]
    %v151 = vld [vmem:[#allocation2 + $0x34] sm:$0xf]
    %v152 = vld [vmem:[#allocation2 + $0x38] sm:$0xf]
    %v153 = vld [vmem:[#allocation2 + $0x3c] sm:$0xf]
    %v154 = vld [vmem:[#allocation2 + $0x40] sm:$0xf]
    %v155 = vld [vmem:[#allocation2 + $0x44] sm:$0xf]
    %v156 = vld [vmem:[#allocation2 + $0x48] sm:$0xf]
    %v157 = vld [vmem:[#allocation2 + $0x4c] sm:$0xf]
    %v158 = vld [vmem:[#allocation2 + $0x50] sm:$0xf]
    %v159 = vld [vmem:[#allocation2 + $0x54] sm:$0xf]
    %v160 = vld [vmem:[#allocation2 + $0x58] sm:$0xf]
    %v161 = vld [vmem:[#allocation2 + $0x5c] sm:$0xf]
    %v162 = vld [vmem:[#allocation2 + $0x60] sm:$0xf]
    %v163 = vld [vmem:[#allocation2 + $0x64] sm:$0xf]
    %v164 = vld [vmem:[#allocation2 + $0x68] sm:$0xf]
    %v165 = vld [vmem:[#allocation2 + $0x6c] sm:$0xf]
    %v166 = vld [vmem:[#allocation2 + $0x70] sm:$0xf]
    %v167 = vld [vmem:[#allocation2 + $0x74] sm:$0xf]
    %v168 = vld [vmem:[#allocation2 + $0x78] sm:$0xf]
    %v169 = vld [vmem:[#allocation2 + $0x7c] sm:$0xf]
    %v170 = vld [vmem:[#allocation2 + $0x80] sm:$0xf]
    %v171 = vld [vmem:[#allocation2 + $0x84] sm:$0xf]
    %v172 = vld [vmem:[#allocation2 + $0x88] sm:$0xf]
    %v173 = vld [vmem:[#allocation2 + $0x8c] sm:$0xf]
    %v174 = vld [vmem:[#allocation2 + $0x90] sm:$0xf]
    %v175 = vld [vmem:[#allocation2 + $0x94] sm:$0xf]
    %v176 = vld [vmem:[#allocation2 + $0x98] sm:$0xf]
    %v177 = vld [vmem:[#allocation2 + $0x9c] sm:$0xf]
    %v178 = vld [vmem:[#allocation2 + $0xa0] sm:$0xf]
    %v179 = vld [vmem:[#allocation2 + $0xa4] sm:$0xf]
    %v180 = vld [vmem:[#allocation2 + $0xa8] sm:$0xf]
    %v181 = vld [vmem:[#allocation2 + $0xac] sm:$0xf]
    %v182 = vld [vmem:[#allocation2 + $0xb0] sm:$0xf]
    %v183 = vld [vmem:[#allocation2 + $0xb4] sm:$0xf]
    %v184 = vld [vmem:[#allocation2 + $0xb8] sm:$0xf]
    %v185 = vld [vmem:[#allocation2 + $0xbc] sm:$0xf]
    %v186 = vld [vmem:[%s2] sm:$0x1]
    %v188 = vlaneseq
    %v189 = vshrl.u32 %v188, 7
    %v190 = vsub.s32 0, %v189
    %v191 = vrot.slane %v186, %v190
    %v241 = vunpack.c.l.b16 %v138
    %v242 = vunpack.c.l.b16 %v139
    %v243 = vunpack.c.l.b16 %v140
    %v244 = vunpack.c.l.b16 %v141
    %v245 = vunpack.c.l.b16 %v142
    %v246 = vunpack.c.l.b16 %v143
    %v247 = vunpack.c.l.b16 %v144
    %v248 = vunpack.c.l.b16 %v145
    %v249 = vunpack.c.l.b16 %v146
    %v250 = vunpack.c.l.b16 %v147
    %v251 = vunpack.c.l.b16 %v148
    %v252 = vunpack.c.l.b16 %v149
    %v253 = vunpack.c.l.b16 %v150
    %v254 = vunpack.c.l.b16 %v151
    %v255 = vunpack.c.l.b16 %v152
    %v256 = vunpack.c.l.b16 %v153
    %v257 = vunpack.c.l.b16 %v154
    %v258 = vunpack.c.l.b16 %v155
    %v259 = vunpack.c.l.b16 %v156
    %v260 = vunpack.c.l.b16 %v157
    %v261 = vunpack.c.l.b16 %v158
    %v262 = vunpack.c.l.b16 %v159
    %v263 = vunpack.c.l.b16 %v160
    %v264 = vunpack.c.l.b16 %v161
    %v265 = vunpack.c.l.b16 %v162
    %v266 = vunpack.c.l.b16 %v163
    %v267 = vunpack.c.l.b16 %v164
    %v268 = vunpack.c.l.b16 %v165
    %v269 = vunpack.c.l.b16 %v166
    %v270 = vunpack.c.l.b16 %v167
    %v271 = vunpack.c.l.b16 %v168
    %v272 = vunpack.c.l.b16 %v169
    %v273 = vunpack.c.l.b16 %v170
    %v274 = vunpack.c.l.b16 %v171
    %v275 = vunpack.c.l.b16 %v172
    %v276 = vunpack.c.l.b16 %v173
    %v277 = vunpack.c.l.b16 %v174
    %v278 = vunpack.c.l.b16 %v175
    %v279 = vunpack.c.l.b16 %v176
    %v280 = vunpack.c.l.b16 %v177
    %v281 = vunpack.c.l.b16 %v178
    %v282 = vunpack.c.l.b16 %v179
    %v283 = vunpack.c.l.b16 %v180
    %v284 = vunpack.c.l.b16 %v181
    %v285 = vunpack.c.l.b16 %v182
    %v286 = vunpack.c.l.b16 %v183
    %v287 = vunpack.c.l.b16 %v184
    %v288 = vunpack.c.l.b16 %v185
    %v289 = vpack.c.b16 %v242, %v241
    %v290 = vpack.c.b16 %v244, %v243
    %v291 = vpack.c.b16 %v246, %v245
    %v292 = vpack.c.b16 %v248, %v247
    %v293 = vpack.c.b16 %v250, %v249
    %v294 = vpack.c.b16 %v252, %v251
    %v295 = vpack.c.b16 %v254, %v253
    %v296 = vpack.c.b16 %v256, %v255
    %v297 = vpack.c.b16 %v258, %v257
    %v298 = vpack.c.b16 %v260, %v259
    %v299 = vpack.c.b16 %v262, %v261
    %v300 = vpack.c.b16 %v264, %v263
    %v301 = vpack.c.b16 %v266, %v265
    %v302 = vpack.c.b16 %v268, %v267
    %v303 = vpack.c.b16 %v270, %v269
    %v304 = vpack.c.b16 %v272, %v271
    %v305 = vpack.c.b16 %v274, %v273
    %v306 = vpack.c.b16 %v276, %v275
    %v307 = vpack.c.b16 %v278, %v277
    %v308 = vpack.c.b16 %v280, %v279
    %v309 = vpack.c.b16 %v282, %v281
    %v310 = vpack.c.b16 %v284, %v283
    %v311 = vpack.c.b16 %v286, %v285
    %v312 = vpack.c.b16 %v288, %v287
    %337 = vmatprep.subr.bf16.mxu0 0
    %338 = vmatpush1.bf16.msra.mxu0 %v296
    %339 = vmatprep.subr.bf16.mxu0 0
    %340 = vmatpush1.bf16.msra.mxu0 %v295
    %341 = vmatprep.subr.bf16.mxu0 0
    %342 = vmatpush1.bf16.msra.mxu0 %v294
    %343 = vmatprep.subr.bf16.mxu0 0
    %344 = vmatpush1.bf16.msra.mxu0 %v293
    %345 = vmatprep.subr.bf16.mxu0 0
    %346 = vmatpush1.bf16.msra.mxu0 %v292
    %347 = vmatprep.subr.bf16.mxu0 0
    %348 = vmatpush1.bf16.msra.mxu0 %v291
    %349 = vmatprep.subr.bf16.mxu0 0
    %350 = vmatpush1.bf16.msra.mxu0 %v290
    %351 = vmatprep.subr.bf16.mxu0 0
    %352 = vmatpush1.bf16.msra.mxu0 %v289
    %353 = vmatprep.subr.bf16.mxu0 0
    %354 = vmatpush2.bf16.msra.mxu0 %v304
    %355 = vmatprep.subr.bf16.mxu0 0
    %356 = vmatpush2.bf16.msra.mxu0 %v303
    %357 = vmatprep.subr.bf16.mxu0 0
    %358 = vmatpush2.bf16.msra.mxu0 %v302
    %359 = vmatprep.subr.bf16.mxu0 0
    %360 = vmatpush2.bf16.msra.mxu0 %v301
    %361 = vmatprep.subr.bf16.mxu0 0
    %362 = vmatpush2.bf16.msra.mxu0 %v300
    %363 = vmatprep.subr.bf16.mxu0 0
    %364 = vmatpush2.bf16.msra.mxu0 %v299
    %365 = vmatprep.subr.bf16.mxu0 0
    %366 = vmatpush2.bf16.msra.mxu0 %v298
    %367 = vmatprep.subr.bf16.mxu0 0
    %368 = vmatpush2.bf16.msra.mxu0 %v297
    %369 = vmatprep.mubr.bf16.mxu0 %v126
    %370 = vmatmul.mubr.bf16.gmra.mxu0 %v118
    %v371 = vpop.f32.mrf.mxu0
    %v372 = vadd.f32 %v191, %v371
    %v373 = vpop.f32.mrf.mxu0
    %v374 = vpop.f32.mrf.mxu0
    %v375 = vadd.f32 %v191, %v374
    %v376 = vpop.f32.mrf.mxu0
    %377 = vmatprep.mubr.bf16.mxu0 %v127
    %378 = vmatmul.mubr.bf16.gmra.mxu0 %v119
    %v379 = vpop.f32.mrf.mxu0
    %v380 = vadd.f32 %v191, %v379
    %v381 = vpop.f32.mrf.mxu0
    %v382 = vpop.f32.mrf.mxu0
    %v383 = vadd.f32 %v191, %v382
    %v384 = vpop.f32.mrf.mxu0
    %385 = vdwg.mxu0
    %386 = vmatprep.subr.bf16.mxu0 0
    %387 = vmatpush1.bf16.msra.mxu0 %v312
    %388 = vmatprep.subr.bf16.mxu0 0
    %389 = vmatpush1.bf16.msra.mxu0 %v311
    %390 = vmatprep.subr.bf16.mxu0 0
    %391 = vmatpush1.bf16.msra.mxu0 %v310
    %392 = vmatprep.subr.bf16.mxu0 0
    %393 = vmatpush1.bf16.msra.mxu0 %v309
    %394 = vmatprep.subr.bf16.mxu0 0
    %395 = vmatpush1.bf16.msra.mxu0 %v308
    %396 = vmatprep.subr.bf16.mxu0 0
    %397 = vmatpush1.bf16.msra.mxu0 %v307
    %398 = vmatprep.subr.bf16.mxu0 0
    %399 = vmatpush1.bf16.msra.mxu0 %v306
    %400 = vmatprep.subr.bf16.mxu0 0
    %401 = vmatpush1.bf16.msra.mxu0 %v305
    %402 = vmatprep.subr.bf16.mxu0 0
    %403 = vmatpush2.bf16.msra.mxu0 0
    %404 = vmatprep.subr.bf16.mxu0 0
    %405 = vmatpush2.bf16.msra.mxu0 0
    %406 = vmatprep.subr.bf16.mxu0 0
    %407 = vmatpush2.bf16.msra.mxu0 0
    %408 = vmatprep.subr.bf16.mxu0 0
    %409 = vmatpush2.bf16.msra.mxu0 0
    %410 = vmatprep.subr.bf16.mxu0 0
    %411 = vmatpush2.bf16.msra.mxu0 0
    %412 = vmatprep.subr.bf16.mxu0 0
    %413 = vmatpush2.bf16.msra.mxu0 0
    %414 = vmatprep.subr.bf16.mxu0 0
    %415 = vmatpush2.bf16.msra.mxu0 0
    %416 = vmatprep.subr.bf16.mxu0 0
    %417 = vmatpush2.bf16.msra.mxu0 0
    %418 = vmatprep.mubr.bf16.mxu0 0
    %419 = vmatmul.mubr.bf16.gmra.mxu0 %v134
    %v420 = vpop.f32.mrf.mxu0
    %v421 = vadd.f32 %v372, %v420
    %v422 = vpop.f32.mrf.mxu0
    %v423 = vpop.f32.mrf.mxu0
    %v424 = vadd.f32 %v375, %v423
    %v425 = vpop.f32.mrf.mxu0
    %426 = vmatprep.mubr.bf16.mxu0 0
    %427 = vmatmul.mubr.bf16.gmra.mxu0 %v135
    %v428 = vpop.f32.mrf.mxu0
    %v429 = vadd.f32 %v380, %v428
    %v430 = vpop.f32.mrf.mxu0
    %v431 = vpop.f32.mrf.mxu0
    %v432 = vadd.f32 %v383, %v431
    %v433 = vpop.f32.mrf.mxu0
    %434 = vdwg.mxu0
    %v435 = vmax.f32 %v421, 0.0
    %v436 = vmax.f32 %v424, 0.0
    %v437 = vmax.f32 %v429, 0.0
    %v438 = vmax.f32 %v432, 0.0
    %439 = vst [vmem:[#allocation5] sm:$0xff] %v435
    %440 = vst [vmem:[#allocation5 + $0x8] sm:$0xff] %v436
    %441 = vst [vmem:[#allocation5 + $0x10] sm:$0xff] %v437
    %442 = vst [vmem:[#allocation5 + $0x18] sm:$0xff] %v438
    // Predicated region
    $region18: #{basic_conv_apply.1} parent=1 // pred_check
      _
    $region19: #{basic_conv_apply.1} parent=1 // pred_check_branch
      %444 = sbr.rel (0) target = $region21
    $region20: #{basic_conv_apply.1} parent=1 // pred_region
      %s446 = ssub.s32 512, 512
      %447 = vsyncadd [#allocation4], %s446
      %s448 = sshll.u32 [#allocation5], 4
      %s449 = int_to_ptr.vmem [resolvable:$true] %s448
      %454 = dma.vmem_to_hbm [thread:$0]  %s449, 512, %s3, [#allocation4], 128, 128, 8
    $region21: #{basic_conv_apply.1} parent=1 // pred_fallthru
      _
    // Predicated region
    $region22: #{basic_conv_apply.1} parent=1 // pred_check
      _
    $region23: #{basic_conv_apply.1} parent=1 // pred_check_branch
      %456 = sbr.rel (0) target = $region25
    $region24: #{basic_conv_apply.1} parent=1 // pred_region
      %457 = dma.done [#allocation4], 512
    $region25: #{basic_conv_apply.1} parent=1 // pred_fallthru
      _
    %458 = vsyncpa [#allocation3], 1
    %459 = vsyncpa [#allocation4], 1

</llo_original>
